<compile_context>
chip_gen: v6e
topology: v6e:2x2x1
jax: 0.10.0
libtpu: 0.0.40
codegen_flags: <defaults>
</compile_context>

<pallas_src>
import functools

import jax
import jax.numpy as jnp
from jax.experimental import pallas as pl
from jax.experimental.pallas import tpu as pltpu


def _round8(n):
    return ((n + 7) // 8) * 8


def gat_layer_kernel(x_ref, t_ref, w_ref, aux_ref, o_ref, *,
                     heads, head_dim, hidden, seq, block_b):
    H, d, S, Bt = hidden, head_dim, seq, block_b
    hs = heads * S
    f32 = jnp.float32
    waug_rows = H + S * H
    r_seg = _round8(hs)
    r_segT = _round8(heads)
    bias_row = r_seg + r_segT

    x = x_ref[...]                                      # (Bt*S, H + S*H) cdt
    t = t_ref[...]                                      # (Bt*S, H)       cdt

    waug = w_ref[0:waug_rows, 0:H + hs]                 # [[w_gat|wdst_rep],[0|Wsrc_big]]
    wcomb = w_ref[waug_rows:waug_rows + 2 * H, 0:H]     # [[w_fuse_top],[w_proj@w_fuse_bot]]
    seg = aux_ref[0:hs, 0:heads]                        # (heads*S, heads) 0/1, f32
    segT = aux_ref[r_seg:r_seg + heads, 0:hs]           # (heads, heads*S) 0/1, f32
    bias = aux_ref[bias_row:bias_row + 1, 0:H]          # (1, H) folded bias, f32

    # one wide MXU pass: per-head features AND complete attention scores
    xa = jnp.dot(x, waug, preferred_element_type=f32)   # (N, H + heads*S)
    xp = xa[:, :H]                                      # (N, H)  x @ w_gat
    e = xa[:, H:H + hs]                                 # e[(b,i),(h,j)] = a_dst + a_src

    # vectorized LeakyReLU(0.2) + softmax over j within each head segment.
    # The per-row max is constant across a row, so it cancels in every segment's
    # softmax (exact) while keeping all exp arguments <= 0 (no overflow).
    e = jnp.where(e > 0, e, 0.2 * e)
    m = jnp.max(e, axis=-1, keepdims=True)
    p = jnp.exp(e - m)
    ssum = jnp.dot(p, seg, preferred_element_type=f32)          # (N, heads) segment sums
    dinv = pl.reciprocal(ssum, approx=True)                     # EUP slot; ~2^-12 rel err
    alpha = p * jnp.dot(dinv, segT, preferred_element_type=f32)  # (N, heads*S)

    # per-head attention-weighted sums -> y (N, H); kept in f32
    y_blocks = []
    for b in range(Bt):                                 # Bt is small (defaults to 1 step)
        r0 = b * S
        yh = [jnp.dot(alpha[r0:r0 + S, h * S:(h + 1) * S],
                      xp[r0:r0 + S, h * d:(h + 1) * d],
                      preferred_element_type=f32)
              for h in range(heads)]
        y_blocks.append(jnp.concatenate(yh, axis=1))    # (S, H)
    y = y_blocks[0] if Bt == 1 else jnp.concatenate(y_blocks, axis=0)   # (N, H)

    # fused projection + fusion layer: one K=2H matmul + f32 bias, single store
    fused_in = jnp.concatenate([t, y.astype(t.dtype)], axis=1)          # (N, 2H)
    out = jnp.dot(fused_in, wcomb, preferred_element_type=f32) + bias
    o_ref[...] = out.astype(o_ref.dtype)


def _default_block_b(B, S, H, itemsize):
    """One grid step by default; split only when per-step work stays large."""
    def blk_bytes(bb):
        rows = bb * S
        # xaug + t + out, double-buffered (weights excluded: constant block)
        return 2 * rows * (2 * H + S * H) * itemsize

    cap = 12 << 20  # leaves headroom inside the 32 MiB scoped VMEM default (v7x-safe)
    divs = [c for c in range(1, B + 1) if B % c == 0]
    fitting = [c for c in divs if blk_bytes(c) <= cap] or [1]
    bb = max(fitting)
    # v7x megacore: keep two "parallel" grid steps only when each step still has
    # plenty of rows to amortize the ~0.5us per-step overhead.
    if bb == B and B % 2 == 0 and (B // 2) * S >= 2048 and blk_bytes(B // 2) <= cap:
        bb = B // 2
    return bb


def graph_attention_layer(hidden_states, transformer_output, params, *,
                          block_b=None, compute_dtype=None):
    B, S, H = hidden_states.shape
    heads = params["heads"]
    assert H % heads == 0 and H % 8 == 0
    d = H // heads
    hs = heads * S
    out_dtype = hidden_states.dtype
    # NOTE: bf16 compute_dtype is only worthwhile on v6e/v7x (v5e has no bf16 VPU/EUP).
    cdt = jnp.dtype(compute_dtype) if compute_dtype is not None else jnp.dtype(out_dtype)

    if block_b is None:
        block_b = _default_block_b(B, S, H, cdt.itemsize)
    assert B % block_b == 0
    n_rows = block_b * S
    n_steps = B // block_b

    f32 = jnp.float32
    w_gat = params["w_gat"].astype(f32)                       # (H, H)
    wf_top = params["w_fuse"][:H, :].astype(f32)              # (H, H)
    wf_bot = params["w_fuse"][H:, :].astype(f32)              # (H, H)
    wpf = params["w_proj"].astype(f32) @ wf_bot               # fold gat_projection into fusion
    b_all = (params["b_gat"].astype(f32) @ wpf
             + params["b_proj"].astype(f32) @ wf_bot
             + params["b_fuse"].astype(f32))                  # (H,) folded bias (kept f32)

    # block-diagonal per-head score maps: a_dst = x @ (w_gat @ adst_bd), same for src
    eye_h = jnp.eye(heads, dtype=f32)
    adst_bd = (params["att_dst"].astype(f32)[:, :, None] * eye_h[:, None, :]).reshape(H, heads)
    asrc_bd = (params["att_src"].astype(f32)[:, :, None] * eye_h[:, None, :]).reshape(H, heads)
    wdst = w_gat @ adst_bd                                    # (H, heads)
    wsrc = w_gat @ asrc_bd                                    # (H, heads)

    # replication baked into weights so the kernel needs no relayouts:
    #   x @ wdst_rep          -> dst score broadcast over source nodes j
    #   x_flat @ Wsrc_big     -> src scores laid out as (h, j) columns
    wdst_rep = jnp.repeat(wdst, S, axis=1)                    # (H, heads*S)
    wsrc_big = jnp.einsum("kh,jp->jkhp", wsrc,
                          jnp.eye(S, dtype=f32)).reshape(S * H, hs)   # (S*H, heads*S)
    waug = jnp.concatenate(
        [jnp.concatenate([w_gat, wdst_rep], axis=1),
         jnp.concatenate([jnp.zeros((S * H, H), f32), wsrc_big], axis=1)],
        axis=0)                                               # (H + S*H, H + heads*S)
    wcomb = jnp.concatenate([wf_top, wpf], axis=0)            # (2H, H)

    # single packed compute-dtype weight buffer (one DMA descriptor)
    wp_cols = max(H + hs, 2 * H)
    def pad_cols(a):
        return jnp.pad(a, ((0, 0), (0, wp_cols - a.shape[1])))
    wpack = jnp.concatenate([pad_cols(waug), pad_cols(wcomb)], axis=0).astype(cdt)

    # tiny always-f32 aux buffer: segment indicators + folded bias
    r_seg, r_segT = _round8(hs), _round8(heads)
    aux_cols = max(hs, H)
    seg = jnp.repeat(eye_h, S, axis=0)                        # (heads*S, heads)
    aux = jnp.zeros((r_seg + r_segT + 8, aux_cols), f32)
    aux = aux.at[0:hs, 0:heads].set(seg)
    aux = aux.at[r_seg:r_seg + heads, 0:hs].set(seg.T)
    aux = aux.at[r_seg + r_segT, 0:H].set(b_all)

    # activations: rows = (b, i); Xaug = [x | flattened per-sample x] so a single
    # matmul yields both xp and the full score matrix (layout plumbing only).
    # NOTE: the flattened copy scales as B*S^2*H elements (same order as the
    # dense S x S attention itself); fine for this layer's small seq lengths.
    x2 = hidden_states.reshape(B * S, H)
    xf_rep = jnp.broadcast_to(hidden_states.reshape(B, 1, S * H),
                              (B, S, S * H)).reshape(B * S, S * H)
    xaug = jnp.concatenate([x2, xf_rep], axis=1).astype(cdt)  # (B*S, H + S*H)
    t2 = transformer_output.reshape(B * S, H).astype(cdt)

    # VMEM limit from actual need, capped generation-safely (<= 32 MiB scoped)
    blk_bytes = (n_rows * (H + S * H) + n_rows * H) * cdt.itemsize \
        + n_rows * H * jnp.dtype(out_dtype).itemsize
    w_bytes = wpack.size * cdt.itemsize + aux.size * 4
    need = 2 * (blk_bytes + w_bytes) + (1 << 20)
    vmem_limit = int(min(32 << 20, max(2 << 20, 2 * need)))

    kernel = functools.partial(gat_layer_kernel, heads=heads, head_dim=d,
                               hidden=H, seq=S, block_b=block_b)

    out = pl.pallas_call(
        kernel,
        out_shape=jax.ShapeDtypeStruct((B * S, H), out_dtype),
        grid_spec=pltpu.PrefetchScalarGridSpec(
            num_scalar_prefetch=0,
            grid=(n_steps,),
            in_specs=[
                pl.BlockSpec((n_rows, H + S * H), lambda i: (i, 0)),   # Xaug rows
                pl.BlockSpec((n_rows, H), lambda i: (i, 0)),           # transformer rows
                pl.BlockSpec(wpack.shape, lambda i: (0, 0)),           # packed weights (cdt)
                pl.BlockSpec(aux.shape, lambda i: (0, 0)),             # seg indicators + bias (f32)
            ],
            out_specs=pl.BlockSpec((n_rows, H), lambda i: (i, 0)),
        ),
        compiler_params=pltpu.CompilerParams(
            dimension_semantics=("parallel",) if n_steps > 1 else ("arbitrary",),
            vmem_limit_bytes=vmem_limit,
        ),
    )(xaug, t2, wpack, aux)
    return out.reshape(B, S, H)


def reference(hidden_states, transformer_output, params):
    """Pure-JAX reference with the literal GATConv formula (eval mode)."""
    B, S, H = hidden_states.shape
    heads = params["heads"]
    d = H // heads
    xp = hidden_states @ params["w_gat"]
    xph = xp.reshape(B, S, heads, d)
    a_src = jnp.einsum("bshd,hd->bsh", xph, params["att_src"])
    a_dst = jnp.einsum("bshd,hd->bsh", xph, params["att_dst"])
    e = a_dst[:, :, None, :] + a_src[:, None, :, :]           # [B, i, j, h]
    e = jnp.where(e > 0, e, 0.2 * e)
    alpha = jax.nn.softmax(e, axis=2)
    gat = jnp.einsum("bijh,bjhd->bihd", alpha, xph).reshape(B, S, H) + params["b_gat"]
    proj = gat @ params["w_proj"] + params["b_proj"]
    fused = jnp.concatenate([transformer_output, proj], -1) @ params["w_fuse"] + params["b_fuse"]
    return fused


if __name__ == "__main__":
    B, S, H, HEADS = 2, 8, 32, 4
    D = H // HEADS

    key = jax.random.PRNGKey(0)
    ks = jax.random.split(key, 10)
    s = 0.1
    params = {
        "heads": HEADS,
        "w_gat": s * jax.random.normal(ks[0], (H, H), jnp.float32),       # GATConv lin (in,out)
        "att_src": s * jax.random.normal(ks[1], (HEADS, D), jnp.float32),
        "att_dst": s * jax.random.normal(ks[2], (HEADS, D), jnp.float32),
        "b_gat": s * jax.random.normal(ks[3], (H,), jnp.float32),
        "w_proj": s * jax.random.normal(ks[4], (H, H), jnp.float32),      # gat_projection
        "b_proj": s * jax.random.normal(ks[5], (H,), jnp.float32),
        "w_fuse": s * jax.random.normal(ks[6], (2 * H, H), jnp.float32),  # fusion
        "b_fuse": s * jax.random.normal(ks[7], (H,), jnp.float32),
    }

    hidden_states = jax.random.normal(ks[8], (B, S, H), jnp.float32)
    transformer_output = jax.random.normal(ks[9], (B, S, H), jnp.float32)

    ref = reference(hidden_states, transformer_output, params)

    # default: whole batch in ONE grid step (no per-step pipeline overhead)
    out = jax.block_until_ready(
        graph_attention_layer(hidden_states, transformer_output, params))
    assert out.shape == (B, S, H)
    assert jnp.allclose(out, ref, rtol=2e-3, atol=2e-3), "f32 mismatch vs reference"

    # exercise the multi-step grid path (one sample per step)
    out_split = jax.block_until_ready(
        graph_attention_layer(hidden_states, transformer_output, params, block_b=1))
    assert jnp.allclose(out_split, ref, rtol=2e-3, atol=2e-3), "blocked mismatch vs reference"

    # bf16 activation/weight DMA + MXU path (softmax, bias, accumulation stay f32);
    # recommended for v6e/v7x, keep f32 on v5e.
    out_bf16 = jax.block_until_ready(
        graph_attention_layer(hidden_states, transformer_output, params,
                              compute_dtype=jnp.bfloat16))
    assert jnp.allclose(out_bf16.astype(jnp.float32), ref, rtol=4e-2, atol=4e-2), \
        "bf16 mismatch vs reference"

    print("KERNEL_OK")
</pallas_src>

<mosaic_0001>
module attributes {stable_mosaic.version = 11 : i64} {
  func.func @gat_layer_kernel(%arg0: i32, %arg1: memref<16x288xf32, #tpu.memory_space<vmem>>, %arg2: memref<16x32xf32, #tpu.memory_space<vmem>>, %arg3: memref<352x64xf32, #tpu.memory_space<vmem>>, %arg4: memref<48x32xf32, #tpu.memory_space<vmem>>, %arg5: memref<16x32xf32, #tpu.memory_space<vmem>>) attributes {dimension_semantics = [#tpu.dimension_semantics<arbitrary>], iteration_bounds = array<i64: 1>, scalar_prefetch = 0 : i64, scratch_operands = 0 : i64, tpu.core_type = #tpu.core_type<tc>, window_params = [{transform_indices = @transform_0, window_bounds = array<i64: 16, 288>}, {transform_indices = @transform_1, window_bounds = array<i64: 16, 32>}, {pipeline_mode = #tpu.pipeline_mode<synchronous>, transform_indices = @transform_2, window_bounds = array<i64: 352, 64>}, {pipeline_mode = #tpu.pipeline_mode<synchronous>, transform_indices = @transform_3, window_bounds = array<i64: 48, 32>}, {transform_indices = @transform_4, window_bounds = array<i64: 16, 32>}]} {
    %c0 = arith.constant 0 : index
    %c0_0 = arith.constant 0 : index
    %0 = vector.load %arg1[%c0, %c0_0] : memref<16x288xf32, #tpu.memory_space<vmem>>, vector<16x288xf32>
    %c0_1 = arith.constant 0 : index
    %c0_2 = arith.constant 0 : index
    %1 = vector.load %arg2[%c0_1, %c0_2] : memref<16x32xf32, #tpu.memory_space<vmem>>, vector<16x32xf32>
    %c0_3 = arith.constant 0 : index
    %c0_4 = arith.constant 0 : index
    %2 = vector.load %arg3[%c0_3, %c0_4] : memref<352x64xf32, #tpu.memory_space<vmem>>, vector<288x64xf32>
    %c288 = arith.constant 288 : index
    %c0_5 = arith.constant 0 : index
    %3 = vector.load %arg3[%c288, %c0_5] : memref<352x64xf32, #tpu.memory_space<vmem>>, vector<64x32xf32>
    %c0_6 = arith.constant 0 : index
    %c0_7 = arith.constant 0 : index
    %4 = vector.load %arg4[%c0_6, %c0_7] : memref<48x32xf32, #tpu.memory_space<vmem>>, vector<32x4xf32>
    %c32 = arith.constant 32 : index
    %c0_8 = arith.constant 0 : index
    %5 = vector.load %arg4[%c32, %c0_8] : memref<48x32xf32, #tpu.memory_space<vmem>>, vector<4x32xf32>
    %c40 = arith.constant 40 : index
    %c0_9 = arith.constant 0 : index
    %6 = vector.load %arg4[%c40, %c0_9] : memref<48x32xf32, #tpu.memory_space<vmem>>, vector<1x32xf32>
    %cst = arith.constant dense<0.000000e+00> : vector<16x64xf32>
    %7 = tpu.matmul %0, %2, %cst {dimension_numbers = #tpu.dot_dimension_numbers<[1], [0], [0], [1], [0, 0, 1, 1], [], []>} : vector<16x288xf32>, vector<288x64xf32>, vector<16x64xf32> -> vector<16x64xf32>
    %8 = vector.extract_strided_slice %7 {offsets = [0, 0], sizes = [16, 32], strides = [1, 1]} : vector<16x64xf32> to vector<16x32xf32>
    %9 = vector.extract_strided_slice %7 {offsets = [0, 32], sizes = [16, 32], strides = [1, 1]} : vector<16x64xf32> to vector<16x32xf32>
    %cst_10 = arith.constant 0.000000e+00 : f32
    %10 = vector.broadcast %cst_10 : f32 to vector<16x32xf32>
    %11 = arith.cmpf ogt, %9, %10 : vector<16x32xf32>
    %cst_11 = arith.constant 2.000000e-01 : f32
    %12 = vector.broadcast %cst_11 : f32 to vector<16x32xf32>
    %13 = arith.mulf %12, %9 : vector<16x32xf32>
    %14 = arith.select %11, %9, %13 : vector<16x32xi1>, vector<16x32xf32>
    %cst_12 = arith.constant dense<0xFF800000> : vector<16xf32>
    %15 = vector.multi_reduction <maximumf>, %14, %cst_12 [1] : vector<16x32xf32> to vector<16xf32>
    %16 = vector.shape_cast %15 : vector<16xf32> to vector<16x1xf32>
    %17 = vector.broadcast %16 : vector<16x1xf32> to vector<16x32xf32>
    %18 = arith.subf %14, %17 : vector<16x32xf32>
    %19 = math.exp %18 : vector<16x32xf32>
    %cst_13 = arith.constant dense<0.000000e+00> : vector<16x4xf32>
    %20 = tpu.matmul %19, %4, %cst_13 {dimension_numbers = #tpu.dot_dimension_numbers<[1], [0], [0], [1], [0, 0, 1, 1], [], []>} : vector<16x32xf32>, vector<32x4xf32>, vector<16x4xf32> -> vector<16x4xf32>
    %21 = tpu.reciprocal %20 {approx = true} : vector<16x4xf32> -> vector<16x4xf32>
    %cst_14 = arith.constant dense<0.000000e+00> : vector<16x32xf32>
    %22 = tpu.matmul %21, %5, %cst_14 {dimension_numbers = #tpu.dot_dimension_numbers<[1], [0], [0], [1], [0, 0, 1, 1], [], []>} : vector<16x4xf32>, vector<4x32xf32>, vector<16x32xf32> -> vector<16x32xf32>
    %23 = arith.mulf %19, %22 : vector<16x32xf32>
    %24 = vector.extract_strided_slice %23 {offsets = [0, 0], sizes = [8, 8], strides = [1, 1]} : vector<16x32xf32> to vector<8x8xf32>
    %25 = vector.extract_strided_slice %8 {offsets = [0, 0], sizes = [8, 8], strides = [1, 1]} : vector<16x32xf32> to vector<8x8xf32>
    %cst_15 = arith.constant dense<0.000000e+00> : vector<8x8xf32>
    %26 = tpu.matmul %24, %25, %cst_15 {dimension_numbers = #tpu.dot_dimension_numbers<[1], [0], [0], [1], [0, 0, 1, 1], [], []>} : vector<8x8xf32>, vector<8x8xf32>, vector<8x8xf32> -> vector<8x8xf32>
    %27 = vector.extract_strided_slice %23 {offsets = [0, 8], sizes = [8, 8], strides = [1, 1]} : vector<16x32xf32> to vector<8x8xf32>
    %28 = vector.extract_strided_slice %8 {offsets = [0, 8], sizes = [8, 8], strides = [1, 1]} : vector<16x32xf32> to vector<8x8xf32>
    %cst_16 = arith.constant dense<0.000000e+00> : vector<8x8xf32>
    %29 = tpu.matmul %27, %28, %cst_16 {dimension_numbers = #tpu.dot_dimension_numbers<[1], [0], [0], [1], [0, 0, 1, 1], [], []>} : vector<8x8xf32>, vector<8x8xf32>, vector<8x8xf32> -> vector<8x8xf32>
    %30 = vector.extract_strided_slice %23 {offsets = [0, 16], sizes = [8, 8], strides = [1, 1]} : vector<16x32xf32> to vector<8x8xf32>
    %31 = vector.extract_strided_slice %8 {offsets = [0, 16], sizes = [8, 8], strides = [1, 1]} : vector<16x32xf32> to vector<8x8xf32>
    %cst_17 = arith.constant dense<0.000000e+00> : vector<8x8xf32>
    %32 = tpu.matmul %30, %31, %cst_17 {dimension_numbers = #tpu.dot_dimension_numbers<[1], [0], [0], [1], [0, 0, 1, 1], [], []>} : vector<8x8xf32>, vector<8x8xf32>, vector<8x8xf32> -> vector<8x8xf32>
    %33 = vector.extract_strided_slice %23 {offsets = [0, 24], sizes = [8, 8], strides = [1, 1]} : vector<16x32xf32> to vector<8x8xf32>
    %34 = vector.extract_strided_slice %8 {offsets = [0, 24], sizes = [8, 8], strides = [1, 1]} : vector<16x32xf32> to vector<8x8xf32>
    %cst_18 = arith.constant dense<0.000000e+00> : vector<8x8xf32>
    %35 = tpu.matmul %33, %34, %cst_18 {dimension_numbers = #tpu.dot_dimension_numbers<[1], [0], [0], [1], [0, 0, 1, 1], [], []>} : vector<8x8xf32>, vector<8x8xf32>, vector<8x8xf32> -> vector<8x8xf32>
    %36 = tpu.concatenate %26, %29, %32, %35 in 1 : vector<8x8xf32>, vector<8x8xf32>, vector<8x8xf32>, vector<8x8xf32> -> vector<8x32xf32>
    %37 = vector.extract_strided_slice %23 {offsets = [8, 0], sizes = [8, 8], strides = [1, 1]} : vector<16x32xf32> to vector<8x8xf32>
    %38 = vector.extract_strided_slice %8 {offsets = [8, 0], sizes = [8, 8], strides = [1, 1]} : vector<16x32xf32> to vector<8x8xf32>
    %cst_19 = arith.constant dense<0.000000e+00> : vector<8x8xf32>
    %39 = tpu.matmul %37, %38, %cst_19 {dimension_numbers = #tpu.dot_dimension_numbers<[1], [0], [0], [1], [0, 0, 1, 1], [], []>} : vector<8x8xf32>, vector<8x8xf32>, vector<8x8xf32> -> vector<8x8xf32>
    %40 = vector.extract_strided_slice %23 {offsets = [8, 8], sizes = [8, 8], strides = [1, 1]} : vector<16x32xf32> to vector<8x8xf32>
    %41 = vector.extract_strided_slice %8 {offsets = [8, 8], sizes = [8, 8], strides = [1, 1]} : vector<16x32xf32> to vector<8x8xf32>
    %cst_20 = arith.constant dense<0.000000e+00> : vector<8x8xf32>
    %42 = tpu.matmul %40, %41, %cst_20 {dimension_numbers = #tpu.dot_dimension_numbers<[1], [0], [0], [1], [0, 0, 1, 1], [], []>} : vector<8x8xf32>, vector<8x8xf32>, vector<8x8xf32> -> vector<8x8xf32>
    %43 = vector.extract_strided_slice %23 {offsets = [8, 16], sizes = [8, 8], strides = [1, 1]} : vector<16x32xf32> to vector<8x8xf32>
    %44 = vector.extract_strided_slice %8 {offsets = [8, 16], sizes = [8, 8], strides = [1, 1]} : vector<16x32xf32> to vector<8x8xf32>
    %cst_21 = arith.constant dense<0.000000e+00> : vector<8x8xf32>
    %45 = tpu.matmul %43, %44, %cst_21 {dimension_numbers = #tpu.dot_dimension_numbers<[1], [0], [0], [1], [0, 0, 1, 1], [], []>} : vector<8x8xf32>, vector<8x8xf32>, vector<8x8xf32> -> vector<8x8xf32>
    %46 = vector.extract_strided_slice %23 {offsets = [8, 24], sizes = [8, 8], strides = [1, 1]} : vector<16x32xf32> to vector<8x8xf32>
    %47 = vector.extract_strided_slice %8 {offsets = [8, 24], sizes = [8, 8], strides = [1, 1]} : vector<16x32xf32> to vector<8x8xf32>
    %cst_22 = arith.constant dense<0.000000e+00> : vector<8x8xf32>
    %48 = tpu.matmul %46, %47, %cst_22 {dimension_numbers = #tpu.dot_dimension_numbers<[1], [0], [0], [1], [0, 0, 1, 1], [], []>} : vector<8x8xf32>, vector<8x8xf32>, vector<8x8xf32> -> vector<8x8xf32>
    %49 = tpu.concatenate %39, %42, %45, %48 in 1 : vector<8x8xf32>, vector<8x8xf32>, vector<8x8xf32>, vector<8x8xf32> -> vector<8x32xf32>
    %50 = tpu.concatenate %36, %49 in 0 : vector<8x32xf32>, vector<8x32xf32> -> vector<16x32xf32>
    %51 = tpu.concatenate %1, %50 in 1 : vector<16x32xf32>, vector<16x32xf32> -> vector<16x64xf32>
    %cst_23 = arith.constant dense<0.000000e+00> : vector<16x32xf32>
    %52 = tpu.matmul %51, %3, %cst_23 {dimension_numbers = #tpu.dot_dimension_numbers<[1], [0], [0], [1], [0, 0, 1, 1], [], []>} : vector<16x64xf32>, vector<64x32xf32>, vector<16x32xf32> -> vector<16x32xf32>
    %53 = vector.broadcast %6 : vector<1x32xf32> to vector<16x32xf32>
    %54 = arith.addf %52, %53 : vector<16x32xf32>
    %c0_24 = arith.constant 0 : index
    %c0_25 = arith.constant 0 : index
    %55 = vector.load %arg5[%c0_24, %c0_25] : memref<16x32xf32, #tpu.memory_space<vmem>>, vector<16x32xf32>
    tpu.vector_store %arg5[%c0_24, %c0_25], %54 {strides = array<i32>} : memref<16x32xf32, #tpu.memory_space<vmem>>, vector<16x32xf32>,
    return
  }
  func.func @transform_0(%arg0: i32) -> (i32, i32) {
    %c0_i32 = arith.constant 0 : i32
    %c0_i32_0 = arith.constant 0 : i32
    return %arg0, %c0_i32 : i32, i32
  }
  func.func @transform_1(%arg0: i32) -> (i32, i32) {
    %c0_i32 = arith.constant 0 : i32
    %c0_i32_0 = arith.constant 0 : i32
    return %arg0, %c0_i32 : i32, i32
  }
  func.func @transform_2(%arg0: i32) -> (i32, i32) {
    %c0_i32 = arith.constant 0 : i32
    %c0_i32_0 = arith.constant 0 : i32
    %c0_i32_1 = arith.constant 0 : i32
    return %c0_i32, %c0_i32_0 : i32, i32
  }
  func.func @transform_3(%arg0: i32) -> (i32, i32) {
    %c0_i32 = arith.constant 0 : i32
    %c0_i32_0 = arith.constant 0 : i32
    %c0_i32_1 = arith.constant 0 : i32
    return %c0_i32, %c0_i32_0 : i32, i32
  }
  func.func @transform_4(%arg0: i32) -> (i32, i32) {
    %c0_i32 = arith.constant 0 : i32
    %c0_i32_0 = arith.constant 0 : i32
    return %arg0, %c0_i32 : i32, i32
  }
}

</mosaic_0001>

<llo_original>
// kernel: tpu_custom_call.1
$region0: #{tpu_custom_call.1}
  #allocation0 [shape = 'u32[]', space=smem, size = 0x4, offset = 0x4, fixed_abs, tag = 'smem constant byte address 0x4 - core index']
  #allocation1 [shape = 'u32[144,128]{1,0:T(1,128)}', space=vmem, size = 0x12000, scoped, tag = 'internal scratch']
  %s0 = inlined_call_operand.vmem [shape: f32[16,288], index: 0, kind: input, shape index: {}]
  %s1 = inlined_call_operand.vmem [shape: f32[16,32], index: 1, kind: input, shape index: {}]
  %s2 = inlined_call_operand.vmem [shape: f32[352,64], index: 2, kind: input, shape index: {}]
  %s3 = inlined_call_operand.vmem [shape: f32[48,32], index: 3, kind: input, shape index: {}]
  %s4 = inlined_call_operand.hbm [shape: f32[16,32], index: 4, kind: output, shape index: {}]
  %s5 = sld [smem:[#allocation0]]
  $region26: #{tpu_custom_call.1} parent=0
    _
  %s7 = ssub.s32 1, %s5
  %s8 = scalar_select 0, %s7, %s5
  $region1: #{tpu_custom_call.1} parent=0
    #allocation2 [shape = 'u8[8192]{0}', space=vmem, size = 0x2000, scoped, tag = 'output window, operand 0, single buffered']
    #allocation3 [shape = 's32[1]{0}', space=sflag, size = 0x4, scoped, tag = 'scoped memory for tpu_custom_call.1']
    %9 = vsyncpa [#allocation3], 0
    // Predicated region
    $region2: #{tpu_custom_call.1} parent=1 // pred_check
      _
    $region3: #{tpu_custom_call.1} parent=1 // pred_check_branch
      %11 = sbr.rel (0) target = $region5
    $region4: #{tpu_custom_call.1} parent=1 // pred_region
      _
    $region5: #{tpu_custom_call.1} parent=1 // pred_fallthru
      _
    // Predicated region
    $region6: #{tpu_custom_call.1} parent=1 // pred_check
      _
    $region7: #{tpu_custom_call.1} parent=1 // pred_check_branch
      %13 = sbr.rel (0) target = $region9
    $region8: #{tpu_custom_call.1} parent=1 // pred_region
      _
    $region9: #{tpu_custom_call.1} parent=1 // pred_fallthru
      _
    // Predicated region
    $region10: #{tpu_custom_call.1} parent=1 // pred_check
      _
    $region11: #{tpu_custom_call.1} parent=1 // pred_check_branch
      %15 = sbr.rel (0) target = $region13
    $region12: #{tpu_custom_call.1} parent=1 // pred_region
      _
    $region13: #{tpu_custom_call.1} parent=1 // pred_fallthru
      _
    // Predicated region
    $region14: #{tpu_custom_call.1} parent=1 // pred_check
      _
    $region15: #{tpu_custom_call.1} parent=1 // pred_check_branch
      %17 = sbr.rel (0) target = $region17
    $region16: #{tpu_custom_call.1} parent=1 // pred_region
      _
    $region17: #{tpu_custom_call.1} parent=1 // pred_fallthru
      _
    %v18 = vld [vmem:[%s0] sm:$0xff]
    %v19 = vld [vmem:[%s0 + $0x8] sm:$0xff]
    %v20 = vld [vmem:[%s0 + $0x10] sm:$0xff]
    %v21 = vld [vmem:[%s0 + $0x18] sm:$0xff]
    %v22 = vld [vmem:[%s0 + $0x20] sm:$0xff]
    %v23 = vld [vmem:[%s0 + $0x28] sm:$0xff]
    %v24 = vld [vmem:[%s1] sm:$0xff]
    %v25 = vld [vmem:[%s1 + $0x8] sm:$0xff]
    %v26 = vld [vmem:[%s2] sm:$0xff]
    %v27 = vld [vmem:[%s2 + $0x8] sm:$0xff]
    %v28 = vld [vmem:[%s2 + $0x10] sm:$0xff]
    %v29 = vld [vmem:[%s2 + $0x18] sm:$0xff]
    %v30 = vld [vmem:[%s2 + $0x20] sm:$0xff]
    %v31 = vld [vmem:[%s2 + $0x28] sm:$0xff]
    %v32 = vld [vmem:[%s2 + $0x30] sm:$0xff]
    %v33 = vld [vmem:[%s2 + $0x38] sm:$0xff]
    %v34 = vld [vmem:[%s2 + $0x40] sm:$0xff]
    %v35 = vld [vmem:[%s2 + $0x48] sm:$0xff]
    %v36 = vld [vmem:[%s2 + $0x50] sm:$0xff]
    %v37 = vld [vmem:[%s2 + $0x58] sm:$0xff]
    %v38 = vld [vmem:[%s2 + $0x60] sm:$0xff]
    %v39 = vld [vmem:[%s2 + $0x68] sm:$0xff]
    %v40 = vld [vmem:[%s2 + $0x70] sm:$0xff]
    %v41 = vld [vmem:[%s2 + $0x78] sm:$0xff]
    %v42 = vld [vmem:[%s2 + $0x80] sm:$0xff]
    %v43 = vld [vmem:[%s2 + $0x88] sm:$0xff]
    %v44 = vld [vmem:[%s2 + $0x90] sm:$0xff]
    %v45 = vld [vmem:[%s2 + $0x98] sm:$0xff]
    %v46 = vld [vmem:[%s2 + $0xa0] sm:$0xff]
    %v47 = vld [vmem:[%s2 + $0xa8] sm:$0xff]
    %v48 = vld [vmem:[%s2 + $0xb0] sm:$0xff]
    %v49 = vld [vmem:[%s2 + $0xb8] sm:$0xff]
    %v50 = vld [vmem:[%s2 + $0xc0] sm:$0xff]
    %v51 = vld [vmem:[%s2 + $0xc8] sm:$0xff]
    %v52 = vld [vmem:[%s2 + $0xd0] sm:$0xff]
    %v53 = vld [vmem:[%s2 + $0xd8] sm:$0xff]
    %v54 = vld [vmem:[%s2 + $0xe0] sm:$0xff]
    %v55 = vld [vmem:[%s2 + $0xe8] sm:$0xff]
    %v56 = vld [vmem:[%s2 + $0xf0] sm:$0xff]
    %v57 = vld [vmem:[%s2 + $0xf8] sm:$0xff]
    %v58 = vld [vmem:[%s2 + $0x100] sm:$0xff]
    %v59 = vld [vmem:[%s2 + $0x108] sm:$0xff]
    %v60 = vld [vmem:[%s2 + $0x110] sm:$0xff]
    %v61 = vld [vmem:[%s2 + $0x118] sm:$0xff]
    %v62 = vld [vmem:[%s2 + $0x120] sm:$0xff]
    %v63 = vld [vmem:[%s2 + $0x128] sm:$0xff]
    %v64 = vld [vmem:[%s2 + $0x130] sm:$0xff]
    %v65 = vld [vmem:[%s2 + $0x138] sm:$0xff]
    %v66 = vld [vmem:[%s2 + $0x140] sm:$0xff]
    %v67 = vld [vmem:[%s2 + $0x148] sm:$0xff]
    %v68 = vld [vmem:[%s2 + $0x150] sm:$0xff]
    %v69 = vld [vmem:[%s2 + $0x158] sm:$0xff]
    %v70 = vld [vmem:[%s3] sm:$0xff]
    %v71 = vld [vmem:[%s3 + $0x8] sm:$0xff]
    %v72 = vld [vmem:[%s3 + $0x10] sm:$0xff]
    %v73 = vld [vmem:[%s3 + $0x18] sm:$0xff]
    %v74 = vld [vmem:[%s3 + $0x20] sm:$0xf]
    %v75 = vld [vmem:[%s3 + $0x28] sm:$0x1]
    %vm76 = vcmask 261120
    %v78 = vsel %vm76, %v20, 0
    %v81 = vsel %vm76, %v23, 0
    %83 = vmatprep.subr.mxu0 0.0
    %84 = vmatpush1.msra.mxu0 %v41
    %85 = vmatprep.subr.mxu0 0.0
    %86 = vmatpush1.msra.mxu0 %v40
    %87 = vmatprep.subr.mxu0 0.0
    %88 = vmatpush1.msra.mxu0 %v39
    %89 = vmatprep.subr.mxu0 0.0
    %90 = vmatpush1.msra.mxu0 %v38
    %91 = vmatprep.subr.mxu0 0.0
    %92 = vmatpush1.msra.mxu0 %v37
    %93 = vmatprep.subr.mxu0 0.0
    %94 = vmatpush1.msra.mxu0 %v36
    %95 = vmatprep.subr.mxu0 0.0
    %96 = vmatpush1.msra.mxu0 %v35
    %97 = vmatprep.subr.mxu0 0.0
    %98 = vmatpush1.msra.mxu0 %v34
    %99 = vmatprep.subr.mxu0 0.0
    %100 = vmatpush1.msra.mxu0 %v33
    %101 = vmatprep.subr.mxu0 0.0
    %102 = vmatpush1.msra.mxu0 %v32
    %103 = vmatprep.subr.mxu0 0.0
    %104 = vmatpush1.msra.mxu0 %v31
    %105 = vmatprep.subr.mxu0 0.0
    %106 = vmatpush1.msra.mxu0 %v30
    %107 = vmatprep.subr.mxu0 0.0
    %108 = vmatpush1.msra.mxu0 %v29
    %109 = vmatprep.subr.mxu0 0.0
    %110 = vmatpush1.msra.mxu0 %v28
    %111 = vmatprep.subr.mxu0 0.0
    %112 = vmatpush1.msra.mxu0 %v27
    %113 = vmatprep.subr.mxu0 0.0
    %114 = vmatpush1.msra.mxu0 %v26
    %115 = vmatprep.subr.mxu0 0.0
    %116 = vmatpush2.msra.mxu0 %v57
    %117 = vmatprep.subr.mxu0 0.0
    %118 = vmatpush2.msra.mxu0 %v56
    %119 = vmatprep.subr.mxu0 0.0
    %120 = vmatpush2.msra.mxu0 %v55
    %121 = vmatprep.subr.mxu0 0.0
    %122 = vmatpush2.msra.mxu0 %v54
    %123 = vmatprep.subr.mxu0 0.0
    %124 = vmatpush2.msra.mxu0 %v53
    %125 = vmatprep.subr.mxu0 0.0
    %126 = vmatpush2.msra.mxu0 %v52
    %127 = vmatprep.subr.mxu0 0.0
    %128 = vmatpush2.msra.mxu0 %v51
    %129 = vmatprep.subr.mxu0 0.0
    %130 = vmatpush2.msra.mxu0 %v50
    %131 = vmatprep.subr.mxu0 0.0
    %132 = vmatpush2.msra.mxu0 %v49
    %133 = vmatprep.subr.mxu0 0.0
    %134 = vmatpush2.msra.mxu0 %v48
    %135 = vmatprep.subr.mxu0 0.0
    %136 = vmatpush2.msra.mxu0 %v47
    %137 = vmatprep.subr.mxu0 0.0
    %138 = vmatpush2.msra.mxu0 %v46
    %139 = vmatprep.subr.mxu0 0.0
    %140 = vmatpush2.msra.mxu0 %v45
    %141 = vmatprep.subr.mxu0 0.0
    %142 = vmatpush2.msra.mxu0 %v44
    %143 = vmatprep.subr.mxu0 0.0
    %144 = vmatpush2.msra.mxu0 %v43
    %145 = vmatprep.subr.mxu0 0.0
    %146 = vmatpush2.msra.mxu0 %v42
    %147 = vmatprep.mubr.f32.mxu0 %v19
    %148 = vmatmul.mubr.f32.gmra.mxu0 %v18
    %v149 = vpop.f32.mrf.mxu0
    %v150 = vadd.f32 0.0, %v149
    %v151 = vpop.f32.mrf.mxu0
    %152 = vmatprep.mubr.f32.mxu0 %v22
    %153 = vmatmul.mubr.f32.gmra.mxu0 %v21
    %v154 = vpop.f32.mrf.mxu0
    %v155 = vadd.f32 0.0, %v154
    %v156 = vpop.f32.mrf.mxu0
    %157 = vdwg.mxu0
    %158 = vmatprep.subr.mxu0 0.0
    %159 = vmatpush1.msra.mxu0 0.0
    %160 = vmatprep.subr.mxu0 0.0
    %161 = vmatpush1.msra.mxu0 0.0
    %162 = vmatprep.subr.mxu0 0.0
    %163 = vmatpush1.msra.mxu0 0.0
    %164 = vmatprep.subr.mxu0 0.0
    %165 = vmatpush1.msra.mxu0 0.0
    %166 = vmatprep.subr.mxu0 0.0
    %167 = vmatpush1.msra.mxu0 0.0
    %168 = vmatprep.subr.mxu0 0.0
    %169 = vmatpush1.msra.mxu0 0.0
    %170 = vmatprep.subr.mxu0 0.0
    %171 = vmatpush1.msra.mxu0 0.0
    %172 = vmatprep.subr.mxu0 0.0
    %173 = vmatpush1.msra.mxu0 0.0
    %174 = vmatprep.subr.mxu0 0.0
    %175 = vmatpush1.msra.mxu0 0.0
    %176 = vmatprep.subr.mxu0 0.0
    %177 = vmatpush1.msra.mxu0 0.0
    %178 = vmatprep.subr.mxu0 0.0
    %179 = vmatpush1.msra.mxu0 0.0
    %180 = vmatprep.subr.mxu0 0.0
    %181 = vmatpush1.msra.mxu0 0.0
    %182 = vmatprep.subr.mxu0 0.0
    %183 = vmatpush1.msra.mxu0 %v61
    %184 = vmatprep.subr.mxu0 0.0
    %185 = vmatpush1.msra.mxu0 %v60
    %186 = vmatprep.subr.mxu0 0.0
    %187 = vmatpush1.msra.mxu0 %v59
    %188 = vmatprep.subr.mxu0 0.0
    %189 = vmatpush1.msra.mxu0 %v58
    %190 = vmatprep.subr.mxu0 0.0
    %191 = vmatpush2.msra.mxu0 0.0
    %192 = vmatprep.subr.mxu0 0.0
    %193 = vmatpush2.msra.mxu0 0.0
    %194 = vmatprep.subr.mxu0 0.0
    %195 = vmatpush2.msra.mxu0 0.0
    %196 = vmatprep.subr.mxu0 0.0
    %197 = vmatpush2.msra.mxu0 0.0
    %198 = vmatprep.subr.mxu0 0.0
    %199 = vmatpush2.msra.mxu0 0.0
    %200 = vmatprep.subr.mxu0 0.0
    %201 = vmatpush2.msra.mxu0 0.0
    %202 = vmatprep.subr.mxu0 0.0
    %203 = vmatpush2.msra.mxu0 0.0
    %204 = vmatprep.subr.mxu0 0.0
    %205 = vmatpush2.msra.mxu0 0.0
    %206 = vmatprep.subr.mxu0 0.0
    %207 = vmatpush2.msra.mxu0 0.0
    %208 = vmatprep.subr.mxu0 0.0
    %209 = vmatpush2.msra.mxu0 0.0
    %210 = vmatprep.subr.mxu0 0.0
    %211 = vmatpush2.msra.mxu0 0.0
    %212 = vmatprep.subr.mxu0 0.0
    %213 = vmatpush2.msra.mxu0 0.0
    %214 = vmatprep.subr.mxu0 0.0
    %215 = vmatpush2.msra.mxu0 0.0
    %216 = vmatprep.subr.mxu0 0.0
    %217 = vmatpush2.msra.mxu0 0.0
    %218 = vmatprep.subr.mxu0 0.0
    %219 = vmatpush2.msra.mxu0 0.0
    %220 = vmatprep.subr.mxu0 0.0
    %221 = vmatpush2.msra.mxu0 0.0
    %222 = vmatprep.mubr.f32.mxu0 0.0
    %223 = vmatmul.mubr.f32.gmra.mxu0 %v78
    %v224 = vpop.f32.mrf.mxu0
    %v225 = vadd.f32 %v150, %v224
    %v226 = vpop.f32.mrf.mxu0
    %227 = vmatprep.mubr.f32.mxu0 0.0
    %228 = vmatmul.mubr.f32.gmra.mxu0 %v81
    %v229 = vpop.f32.mrf.mxu0
    %v230 = vadd.f32 %v155, %v229
    %v231 = vpop.f32.mrf.mxu0
    %232 = vdwg.mxu0
    %vm233 = vcmp.gt.f32.partialorder %v225, 0.0
    %vm234 = vcmp.gt.f32.partialorder %v230, 0.0
    %v235 = vmul.f32 %v225, 0.2
    %v236 = vmul.f32 %v230, 0.2
    %v237 = vsel %vm233, %v225, %v235
    %v238 = vsel %vm234, %v230, %v236
    %vm239 = vcmask 523520
    %v240 = vsel %vm239, %v237, -inf
    %241 = vmax.xlane.f32.xlu0 %v240
    %v242 = vpop.xlane.xlu0 %241
    %v243 = vsel %vm239, %v238, -inf
    %244 = vmax.xlane.f32.xlu0 %v243
    %v245 = vpop.xlane.xlu0 %244
    %v246 = vsub.f32 %v237, %v242
    %v247 = vsub.f32 %v238, %v245
    %v248 = vmul.f32 %v246, 1.442695
    %v249 = vpow.pop %v248
    %v250 = vmul.f32 %v247, 1.442695
    %v251 = vpow.pop %v250
    %254 = vrot.lane.b32.xlu0 %v249, 96
    %v255 = vpop.permute.xlu0 %254
    %256 = vrot.lane.b32.xlu0 %v251, 96
    %v257 = vpop.permute.xlu0 %256
    %v258 = vsel %vm76, %v255, 0
    %v260 = vsel %vm76, %v257, 0
    %262 = vmatprep.subr.mxu0 0.0
    %263 = vmatpush1.msra.mxu0 0.0
    %264 = vmatprep.subr.mxu0 0.0
    %265 = vmatpush1.msra.mxu0 0.0
    %266 = vmatprep.subr.mxu0 0.0
    %267 = vmatpush1.msra.mxu0 0.0
    %268 = vmatprep.subr.mxu0 0.0
    %269 = vmatpush1.msra.mxu0 0.0
    %270 = vmatprep.subr.mxu0 0.0
    %271 = vmatpush1.msra.mxu0 0.0
    %272 = vmatprep.subr.mxu0 0.0
    %273 = vmatpush1.msra.mxu0 0.0
    %274 = vmatprep.subr.mxu0 0.0
    %275 = vmatpush1.msra.mxu0 0.0
    %276 = vmatprep.subr.mxu0 0.0
    %277 = vmatpush1.msra.mxu0 0.0
    %278 = vmatprep.subr.mxu0 0.0
    %279 = vmatpush1.msra.mxu0 0.0
    %280 = vmatprep.subr.mxu0 0.0
    %281 = vmatpush1.msra.mxu0 0.0
    %282 = vmatprep.subr.mxu0 0.0
    %283 = vmatpush1.msra.mxu0 0.0
    %284 = vmatprep.subr.mxu0 0.0
    %285 = vmatpush1.msra.mxu0 0.0
    %286 = vmatprep.subr.mxu0 0.0
    %287 = vmatpush1.msra.mxu0 %v73
    %288 = vmatprep.subr.mxu0 0.0
    %289 = vmatpush1.msra.mxu0 %v72
    %290 = vmatprep.subr.mxu0 0.0
    %291 = vmatpush1.msra.mxu0 %v71
    %292 = vmatprep.subr.mxu0 0.0
    %293 = vmatpush1.msra.mxu0 %v70
    %294 = vmatprep.subr.mxu0 0.0
    %295 = vmatpush2.msra.mxu0 0.0
    %296 = vmatprep.subr.mxu0 0.0
    %297 = vmatpush2.msra.mxu0 0.0
    %298 = vmatprep.subr.mxu0 0.0
    %299 = vmatpush2.msra.mxu0 0.0
    %300 = vmatprep.subr.mxu0 0.0
    %301 = vmatpush2.msra.mxu0 0.0
    %302 = vmatprep.subr.mxu0 0.0
    %303 = vmatpush2.msra.mxu0 0.0
    %304 = vmatprep.subr.mxu0 0.0
    %305 = vmatpush2.msra.mxu0 0.0
    %306 = vmatprep.subr.mxu0 0.0
    %307 = vmatpush2.msra.mxu0 0.0
    %308 = vmatprep.subr.mxu0 0.0
    %309 = vmatpush2.msra.mxu0 0.0
    %310 = vmatprep.subr.mxu0 0.0
    %311 = vmatpush2.msra.mxu0 0.0
    %312 = vmatprep.subr.mxu0 0.0
    %313 = vmatpush2.msra.mxu0 0.0
    %314 = vmatprep.subr.mxu0 0.0
    %315 = vmatpush2.msra.mxu0 0.0
    %316 = vmatprep.subr.mxu0 0.0
    %317 = vmatpush2.msra.mxu0 0.0
    %318 = vmatprep.subr.mxu0 0.0
    %319 = vmatpush2.msra.mxu0 0.0
    %320 = vmatprep.subr.mxu0 0.0
    %321 = vmatpush2.msra.mxu0 0.0
    %322 = vmatprep.subr.mxu0 0.0
    %323 = vmatpush2.msra.mxu0 0.0
    %324 = vmatprep.subr.mxu0 0.0
    %325 = vmatpush2.msra.mxu0 0.0
    %326 = vmatprep.mubr.f32.mxu0 0.0
    %327 = vmatmul.mubr.f32.gmra.mxu0 %v258
    %v328 = vpop.f32.mrf.mxu0
    %v329 = vadd.f32 0.0, %v328
    %v330 = vpop.f32.mrf.mxu0
    %331 = vmatprep.mubr.f32.mxu0 0.0
    %332 = vmatmul.mubr.f32.gmra.mxu0 %v260
    %v333 = vpop.f32.mrf.mxu0
    %v334 = vadd.f32 0.0, %v333
    %v335 = vpop.f32.mrf.mxu0
    %336 = vdwg.mxu0
    %v337 = vrcp.pop %v329
    %v338 = vrcp.pop %v334
    %vm339 = vcmask 31744
    %v341 = vsel %vm339, %v337, 0
    %v344 = vsel %vm339, %v338, 0
    %vm346 = vcmask 1043456
    %v348 = vsel %vm346, %v74, 0
    %350 = vmatprep.subr.mxu0 0.0
    %351 = vmatpush1.msra.mxu0 0.0
    %352 = vmatprep.subr.mxu0 0.0
    %353 = vmatpush1.msra.mxu0 0.0
    %354 = vmatprep.subr.mxu0 0.0
    %355 = vmatpush1.msra.mxu0 0.0
    %356 = vmatprep.subr.mxu0 0.0
    %357 = vmatpush1.msra.mxu0 0.0
    %358 = vmatprep.subr.mxu0 0.0
    %359 = vmatpush1.msra.mxu0 0.0
    %360 = vmatprep.subr.mxu0 0.0
    %361 = vmatpush1.msra.mxu0 0.0
    %362 = vmatprep.subr.mxu0 0.0
    %363 = vmatpush1.msra.mxu0 0.0
    %364 = vmatprep.subr.mxu0 0.0
    %365 = vmatpush1.msra.mxu0 0.0
    %366 = vmatprep.subr.mxu0 0.0
    %367 = vmatpush1.msra.mxu0 0.0
    %368 = vmatprep.subr.mxu0 0.0
    %369 = vmatpush1.msra.mxu0 0.0
    %370 = vmatprep.subr.mxu0 0.0
    %371 = vmatpush1.msra.mxu0 0.0
    %372 = vmatprep.subr.mxu0 0.0
    %373 = vmatpush1.msra.mxu0 0.0
    %374 = vmatprep.subr.mxu0 0.0
    %375 = vmatpush1.msra.mxu0 0.0
    %376 = vmatprep.subr.mxu0 0.0
    %377 = vmatpush1.msra.mxu0 0.0
    %378 = vmatprep.subr.mxu0 0.0
    %379 = vmatpush1.msra.mxu0 0.0
    %380 = vmatprep.subr.mxu0 0.0
    %381 = vmatpush1.msra.mxu0 %v348
    %382 = vmatprep.subr.mxu0 0.0
    %383 = vmatpush2.msra.mxu0 0.0
    %384 = vmatprep.subr.mxu0 0.0
    %385 = vmatpush2.msra.mxu0 0.0
    %386 = vmatprep.subr.mxu0 0.0
    %387 = vmatpush2.msra.mxu0 0.0
    %388 = vmatprep.subr.mxu0 0.0
    %389 = vmatpush2.msra.mxu0 0.0
    %390 = vmatprep.subr.mxu0 0.0
    %391 = vmatpush2.msra.mxu0 0.0
    %392 = vmatprep.subr.mxu0 0.0
    %393 = vmatpush2.msra.mxu0 0.0
    %394 = vmatprep.subr.mxu0 0.0
    %395 = vmatpush2.msra.mxu0 0.0
    %396 = vmatprep.subr.mxu0 0.0
    %397 = vmatpush2.msra.mxu0 0.0
    %398 = vmatprep.subr.mxu0 0.0
    %399 = vmatpush2.msra.mxu0 0.0
    %400 = vmatprep.subr.mxu0 0.0
    %401 = vmatpush2.msra.mxu0 0.0
    %402 = vmatprep.subr.mxu0 0.0
    %403 = vmatpush2.msra.mxu0 0.0
    %404 = vmatprep.subr.mxu0 0.0
    %405 = vmatpush2.msra.mxu0 0.0
    %406 = vmatprep.subr.mxu0 0.0
    %407 = vmatpush2.msra.mxu0 0.0
    %408 = vmatprep.subr.mxu0 0.0
    %409 = vmatpush2.msra.mxu0 0.0
    %410 = vmatprep.subr.mxu0 0.0
    %411 = vmatpush2.msra.mxu0 0.0
    %412 = vmatprep.subr.mxu0 0.0
    %413 = vmatpush2.msra.mxu0 0.0
    %414 = vmatprep.mubr.f32.mxu0 0.0
    %415 = vmatmul.mubr.f32.gmra.mxu0 %v341
    %v416 = vpop.f32.mrf.mxu0
    %v417 = vadd.f32 0.0, %v416
    %v418 = vpop.f32.mrf.mxu0
    %419 = vmatprep.mubr.f32.mxu0 0.0
    %420 = vmatmul.mubr.f32.gmra.mxu0 %v344
    %v421 = vpop.f32.mrf.mxu0
    %v422 = vadd.f32 0.0, %v421
    %v423 = vpop.f32.mrf.mxu0
    %424 = vdwg.mxu0
    %427 = vrot.lane.b32.xlu0 %v417, 32
    %v428 = vpop.permute.xlu0 %427
    %429 = vrot.lane.b32.xlu0 %v422, 32
    %v430 = vpop.permute.xlu0 %429
    %v433 = vmul.f32 %v249, %v428
    %v434 = vmul.f32 %v251, %v430
    %436 = vrot.lane.b32.xlu0 %v433, 96
    %v437 = vpop.permute.xlu0 %436
    %vm438 = vcmask 64512
    %v439 = vsel %vm438, %v437, 0
    %441 = vmatprep.subr.mxu0 0.0
    %442 = vmatpush1.msra.mxu0 0.0
    %443 = vmatprep.subr.mxu0 0.0
    %444 = vmatpush1.msra.mxu0 0.0
    %445 = vmatprep.subr.mxu0 0.0
    %446 = vmatpush1.msra.mxu0 0.0
    %447 = vmatprep.subr.mxu0 0.0
    %448 = vmatpush1.msra.mxu0 0.0
    %449 = vmatprep.subr.mxu0 0.0
    %450 = vmatpush1.msra.mxu0 0.0
    %451 = vmatprep.subr.mxu0 0.0
    %452 = vmatpush1.msra.mxu0 0.0
    %453 = vmatprep.subr.mxu0 0.0
    %454 = vmatpush1.msra.mxu0 0.0
    %455 = vmatprep.subr.mxu0 0.0
    %456 = vmatpush1.msra.mxu0 0.0
    %457 = vmatprep.subr.mxu0 0.0
    %458 = vmatpush1.msra.mxu0 0.0
    %459 = vmatprep.subr.mxu0 0.0
    %460 = vmatpush1.msra.mxu0 0.0
    %461 = vmatprep.subr.mxu0 0.0
    %462 = vmatpush1.msra.mxu0 0.0
    %463 = vmatprep.subr.mxu0 0.0
    %464 = vmatpush1.msra.mxu0 0.0
    %465 = vmatprep.subr.mxu0 0.0
    %466 = vmatpush1.msra.mxu0 0.0
    %467 = vmatprep.subr.mxu0 0.0
    %468 = vmatpush1.msra.mxu0 0.0
    %469 = vmatprep.subr.mxu0 0.0
    %470 = vmatpush1.msra.mxu0 0.0
    %471 = vmatprep.subr.mxu0 0.0
    %472 = vmatpush1.msra.mxu0 %v225
    %473 = vmatprep.subr.mxu0 0.0
    %474 = vmatpush2.msra.mxu0 0.0
    %475 = vmatprep.subr.mxu0 0.0
    %476 = vmatpush2.msra.mxu0 0.0
    %477 = vmatprep.subr.mxu0 0.0
    %478 = vmatpush2.msra.mxu0 0.0
    %479 = vmatprep.subr.mxu0 0.0
    %480 = vmatpush2.msra.mxu0 0.0
    %481 = vmatprep.subr.mxu0 0.0
    %482 = vmatpush2.msra.mxu0 0.0
    %483 = vmatprep.subr.mxu0 0.0
    %484 = vmatpush2.msra.mxu0 0.0
    %485 = vmatprep.subr.mxu0 0.0
    %486 = vmatpush2.msra.mxu0 0.0
    %487 = vmatprep.subr.mxu0 0.0
    %488 = vmatpush2.msra.mxu0 0.0
    %489 = vmatprep.subr.mxu0 0.0
    %490 = vmatpush2.msra.mxu0 0.0
    %491 = vmatprep.subr.mxu0 0.0
    %492 = vmatpush2.msra.mxu0 0.0
    %493 = vmatprep.subr.mxu0 0.0
    %494 = vmatpush2.msra.mxu0 0.0
    %495 = vmatprep.subr.mxu0 0.0
    %496 = vmatpush2.msra.mxu0 0.0
    %497 = vmatprep.subr.mxu0 0.0
    %498 = vmatpush2.msra.mxu0 0.0
    %499 = vmatprep.subr.mxu0 0.0
    %500 = vmatpush2.msra.mxu0 0.0
    %501 = vmatprep.subr.mxu0 0.0
    %502 = vmatpush2.msra.mxu0 0.0
    %503 = vmatprep.subr.mxu0 0.0
    %504 = vmatpush2.msra.mxu0 0.0
    %505 = vmatprep.mubr.f32.mxu0 0.0
    %506 = vmatmul.mubr.f32.gmra.mxu0 %v439
    %v507 = vpop.f32.mrf.mxu0
    %v508 = vadd.f32 0.0, %v507
    %v509 = vpop.f32.mrf.mxu0
    %510 = vdwg.mxu0
    %511 = vrot.lane.b32.xlu0 %v433, 88
    %v512 = vpop.permute.xlu0 %511
    %514 = vrot.lane.b32.xlu0 %v225, 120
    %v515 = vpop.permute.xlu0 %514
    %v517 = vsel %vm438, %v512, 0
    %519 = vmatprep.subr.mxu0 0.0
    %520 = vmatpush1.msra.mxu0 0.0
    %521 = vmatprep.subr.mxu0 0.0
    %522 = vmatpush1.msra.mxu0 0.0
    %523 = vmatprep.subr.mxu0 0.0
    %524 = vmatpush1.msra.mxu0 0.0
    %525 = vmatprep.subr.mxu0 0.0
    %526 = vmatpush1.msra.mxu0 0.0
    %527 = vmatprep.subr.mxu0 0.0
    %528 = vmatpush1.msra.mxu0 0.0
    %529 = vmatprep.subr.mxu0 0.0
    %530 = vmatpush1.msra.mxu0 0.0
    %531 = vmatprep.subr.mxu0 0.0
    %532 = vmatpush1.msra.mxu0 0.0
    %533 = vmatprep.subr.mxu0 0.0
    %534 = vmatpush1.msra.mxu0 0.0
    %535 = vmatprep.subr.mxu0 0.0
    %536 = vmatpush1.msra.mxu0 0.0
    %537 = vmatprep.subr.mxu0 0.0
    %538 = vmatpush1.msra.mxu0 0.0
    %539 = vmatprep.subr.mxu0 0.0
    %540 = vmatpush1.msra.mxu0 0.0
    %541 = vmatprep.subr.mxu0 0.0
    %542 = vmatpush1.msra.mxu0 0.0
    %543 = vmatprep.subr.mxu0 0.0
    %544 = vmatpush1.msra.mxu0 0.0
    %545 = vmatprep.subr.mxu0 0.0
    %546 = vmatpush1.msra.mxu0 0.0
    %547 = vmatprep.subr.mxu0 0.0
    %548 = vmatpush1.msra.mxu0 0.0
    %549 = vmatprep.subr.mxu0 0.0
    %550 = vmatpush1.msra.mxu0 %v515
    %551 = vmatprep.subr.mxu0 0.0
    %552 = vmatpush2.msra.mxu0 0.0
    %553 = vmatprep.subr.mxu0 0.0
    %554 = vmatpush2.msra.mxu0 0.0
    %555 = vmatprep.subr.mxu0 0.0
    %556 = vmatpush2.msra.mxu0 0.0
    %557 = vmatprep.subr.mxu0 0.0
    %558 = vmatpush2.msra.mxu0 0.0
    %559 = vmatprep.subr.mxu0 0.0
    %560 = vmatpush2.msra.mxu0 0.0
    %561 = vmatprep.subr.mxu0 0.0
    %562 = vmatpush2.msra.mxu0 0.0
    %563 = vmatprep.subr.mxu0 0.0
    %564 = vmatpush2.msra.mxu0 0.0
    %565 = vmatprep.subr.mxu0 0.0
    %566 = vmatpush2.msra.mxu0 0.0
    %567 = vmatprep.subr.mxu0 0.0
    %568 = vmatpush2.msra.mxu0 0.0
    %569 = vmatprep.subr.mxu0 0.0
    %570 = vmatpush2.msra.mxu0 0.0
    %571 = vmatprep.subr.mxu0 0.0
    %572 = vmatpush2.msra.mxu0 0.0
    %573 = vmatprep.subr.mxu0 0.0
    %574 = vmatpush2.msra.mxu0 0.0
    %575 = vmatprep.subr.mxu0 0.0
    %576 = vmatpush2.msra.mxu0 0.0
    %577 = vmatprep.subr.mxu0 0.0
    %578 = vmatpush2.msra.mxu0 0.0
    %579 = vmatprep.subr.mxu0 0.0
    %580 = vmatpush2.msra.mxu0 0.0
    %581 = vmatprep.subr.mxu0 0.0
    %582 = vmatpush2.msra.mxu0 0.0
    %583 = vmatprep.mubr.f32.mxu0 0.0
    %584 = vmatmul.mubr.f32.gmra.mxu0 %v517
    %v585 = vpop.f32.mrf.mxu0
    %v586 = vadd.f32 0.0, %v585
    %v587 = vpop.f32.mrf.mxu0
    %588 = vdwg.mxu0
    %589 = vrot.lane.b32.xlu0 %v433, 80
    %v590 = vpop.permute.xlu0 %589
    %591 = vrot.lane.b32.xlu0 %v225, 112
    %v592 = vpop.permute.xlu0 %591
    %v594 = vsel %vm438, %v590, 0
    %596 = vmatprep.subr.mxu0 0.0
    %597 = vmatpush1.msra.mxu0 0.0
    %598 = vmatprep.subr.mxu0 0.0
    %599 = vmatpush1.msra.mxu0 0.0
    %600 = vmatprep.subr.mxu0 0.0
    %601 = vmatpush1.msra.mxu0 0.0
    %602 = vmatprep.subr.mxu0 0.0
    %603 = vmatpush1.msra.mxu0 0.0
    %604 = vmatprep.subr.mxu0 0.0
    %605 = vmatpush1.msra.mxu0 0.0
    %606 = vmatprep.subr.mxu0 0.0
    %607 = vmatpush1.msra.mxu0 0.0
    %608 = vmatprep.subr.mxu0 0.0
    %609 = vmatpush1.msra.mxu0 0.0
    %610 = vmatprep.subr.mxu0 0.0
    %611 = vmatpush1.msra.mxu0 0.0
    %612 = vmatprep.subr.mxu0 0.0
    %613 = vmatpush1.msra.mxu0 0.0
    %614 = vmatprep.subr.mxu0 0.0
    %615 = vmatpush1.msra.mxu0 0.0
    %616 = vmatprep.subr.mxu0 0.0
    %617 = vmatpush1.msra.mxu0 0.0
    %618 = vmatprep.subr.mxu0 0.0
    %619 = vmatpush1.msra.mxu0 0.0
    %620 = vmatprep.subr.mxu0 0.0
    %621 = vmatpush1.msra.mxu0 0.0
    %622 = vmatprep.subr.mxu0 0.0
    %623 = vmatpush1.msra.mxu0 0.0
    %624 = vmatprep.subr.mxu0 0.0
    %625 = vmatpush1.msra.mxu0 0.0
    %626 = vmatprep.subr.mxu0 0.0
    %627 = vmatpush1.msra.mxu0 %v592
    %628 = vmatprep.subr.mxu0 0.0
    %629 = vmatpush2.msra.mxu0 0.0
    %630 = vmatprep.subr.mxu0 0.0
    %631 = vmatpush2.msra.mxu0 0.0
    %632 = vmatprep.subr.mxu0 0.0
    %633 = vmatpush2.msra.mxu0 0.0
    %634 = vmatprep.subr.mxu0 0.0
    %635 = vmatpush2.msra.mxu0 0.0
    %636 = vmatprep.subr.mxu0 0.0
    %637 = vmatpush2.msra.mxu0 0.0
    %638 = vmatprep.subr.mxu0 0.0
    %639 = vmatpush2.msra.mxu0 0.0
    %640 = vmatprep.subr.mxu0 0.0
    %641 = vmatpush2.msra.mxu0 0.0
    %642 = vmatprep.subr.mxu0 0.0
    %643 = vmatpush2.msra.mxu0 0.0
    %644 = vmatprep.subr.mxu0 0.0
    %645 = vmatpush2.msra.mxu0 0.0
    %646 = vmatprep.subr.mxu0 0.0
    %647 = vmatpush2.msra.mxu0 0.0
    %648 = vmatprep.subr.mxu0 0.0
    %649 = vmatpush2.msra.mxu0 0.0
    %650 = vmatprep.subr.mxu0 0.0
    %651 = vmatpush2.msra.mxu0 0.0
    %652 = vmatprep.subr.mxu0 0.0
    %653 = vmatpush2.msra.mxu0 0.0
    %654 = vmatprep.subr.mxu0 0.0
    %655 = vmatpush2.msra.mxu0 0.0
    %656 = vmatprep.subr.mxu0 0.0
    %657 = vmatpush2.msra.mxu0 0.0
    %658 = vmatprep.subr.mxu0 0.0
    %659 = vmatpush2.msra.mxu0 0.0
    %660 = vmatprep.mubr.f32.mxu0 0.0
    %661 = vmatmul.mubr.f32.gmra.mxu0 %v594
    %v662 = vpop.f32.mrf.mxu0
    %v663 = vadd.f32 0.0, %v662
    %v664 = vpop.f32.mrf.mxu0
    %665 = vdwg.mxu0
    %666 = vrot.lane.b32.xlu0 %v433, 72
    %v667 = vpop.permute.xlu0 %666
    %668 = vrot.lane.b32.xlu0 %v225, 104
    %v669 = vpop.permute.xlu0 %668
    %v671 = vsel %vm438, %v667, 0
    %673 = vmatprep.subr.mxu0 0.0
    %674 = vmatpush1.msra.mxu0 0.0
    %675 = vmatprep.subr.mxu0 0.0
    %676 = vmatpush1.msra.mxu0 0.0
    %677 = vmatprep.subr.mxu0 0.0
    %678 = vmatpush1.msra.mxu0 0.0
    %679 = vmatprep.subr.mxu0 0.0
    %680 = vmatpush1.msra.mxu0 0.0
    %681 = vmatprep.subr.mxu0 0.0
    %682 = vmatpush1.msra.mxu0 0.0
    %683 = vmatprep.subr.mxu0 0.0
    %684 = vmatpush1.msra.mxu0 0.0
    %685 = vmatprep.subr.mxu0 0.0
    %686 = vmatpush1.msra.mxu0 0.0
    %687 = vmatprep.subr.mxu0 0.0
    %688 = vmatpush1.msra.mxu0 0.0
    %689 = vmatprep.subr.mxu0 0.0
    %690 = vmatpush1.msra.mxu0 0.0
    %691 = vmatprep.subr.mxu0 0.0
    %692 = vmatpush1.msra.mxu0 0.0
    %693 = vmatprep.subr.mxu0 0.0
    %694 = vmatpush1.msra.mxu0 0.0
    %695 = vmatprep.subr.mxu0 0.0
    %696 = vmatpush1.msra.mxu0 0.0
    %697 = vmatprep.subr.mxu0 0.0
    %698 = vmatpush1.msra.mxu0 0.0
    %699 = vmatprep.subr.mxu0 0.0
    %700 = vmatpush1.msra.mxu0 0.0
    %701 = vmatprep.subr.mxu0 0.0
    %702 = vmatpush1.msra.mxu0 0.0
    %703 = vmatprep.subr.mxu0 0.0
    %704 = vmatpush1.msra.mxu0 %v669
    %705 = vmatprep.subr.mxu0 0.0
    %706 = vmatpush2.msra.mxu0 0.0
    %707 = vmatprep.subr.mxu0 0.0
    %708 = vmatpush2.msra.mxu0 0.0
    %709 = vmatprep.subr.mxu0 0.0
    %710 = vmatpush2.msra.mxu0 0.0
    %711 = vmatprep.subr.mxu0 0.0
    %712 = vmatpush2.msra.mxu0 0.0
    %713 = vmatprep.subr.mxu0 0.0
    %714 = vmatpush2.msra.mxu0 0.0
    %715 = vmatprep.subr.mxu0 0.0
    %716 = vmatpush2.msra.mxu0 0.0
    %717 = vmatprep.subr.mxu0 0.0
    %718 = vmatpush2.msra.mxu0 0.0
    %719 = vmatprep.subr.mxu0 0.0
    %720 = vmatpush2.msra.mxu0 0.0
    %721 = vmatprep.subr.mxu0 0.0
    %722 = vmatpush2.msra.mxu0 0.0
    %723 = vmatprep.subr.mxu0 0.0
    %724 = vmatpush2.msra.mxu0 0.0
    %725 = vmatprep.subr.mxu0 0.0
    %726 = vmatpush2.msra.mxu0 0.0
    %727 = vmatprep.subr.mxu0 0.0
    %728 = vmatpush2.msra.mxu0 0.0
    %729 = vmatprep.subr.mxu0 0.0
    %730 = vmatpush2.msra.mxu0 0.0
    %731 = vmatprep.subr.mxu0 0.0
    %732 = vmatpush2.msra.mxu0 0.0
    %733 = vmatprep.subr.mxu0 0.0
    %734 = vmatpush2.msra.mxu0 0.0
    %735 = vmatprep.subr.mxu0 0.0
    %736 = vmatpush2.msra.mxu0 0.0
    %737 = vmatprep.mubr.f32.mxu0 0.0
    %738 = vmatmul.mubr.f32.gmra.mxu0 %v671
    %v739 = vpop.f32.mrf.mxu0
    %v740 = vadd.f32 0.0, %v739
    %v741 = vpop.f32.mrf.mxu0
    %742 = vdwg.mxu0
    %744 = vrot.lane.b32.xlu0 %v586, 8
    %v745 = vpop.permute.xlu0 %744
    %748 = vrot.lane.b32.xlu0 %v663, 16
    %v749 = vpop.permute.xlu0 %748
    %752 = vrot.lane.b32.xlu0 %v740, 24
    %v753 = vpop.permute.xlu0 %752
    %v755 = vsel %vm438, %v508, %v745
    %vm756 = vcmask 130048
    %v757 = vsel %vm756, %v755, %v749
    %vm758 = vcmask 195584
    %v759 = vsel %vm758, %v757, %v753
    %761 = vrot.lane.b32.xlu0 %v434, 96
    %v762 = vpop.permute.xlu0 %761
    %v763 = vsel %vm438, %v762, 0
    %765 = vmatprep.subr.mxu0 0.0
    %766 = vmatpush1.msra.mxu0 0.0
    %767 = vmatprep.subr.mxu0 0.0
    %768 = vmatpush1.msra.mxu0 0.0
    %769 = vmatprep.subr.mxu0 0.0
    %770 = vmatpush1.msra.mxu0 0.0
    %771 = vmatprep.subr.mxu0 0.0
    %772 = vmatpush1.msra.mxu0 0.0
    %773 = vmatprep.subr.mxu0 0.0
    %774 = vmatpush1.msra.mxu0 0.0
    %775 = vmatprep.subr.mxu0 0.0
    %776 = vmatpush1.msra.mxu0 0.0
    %777 = vmatprep.subr.mxu0 0.0
    %778 = vmatpush1.msra.mxu0 0.0
    %779 = vmatprep.subr.mxu0 0.0
    %780 = vmatpush1.msra.mxu0 0.0
    %781 = vmatprep.subr.mxu0 0.0
    %782 = vmatpush1.msra.mxu0 0.0
    %783 = vmatprep.subr.mxu0 0.0
    %784 = vmatpush1.msra.mxu0 0.0
    %785 = vmatprep.subr.mxu0 0.0
    %786 = vmatpush1.msra.mxu0 0.0
    %787 = vmatprep.subr.mxu0 0.0
    %788 = vmatpush1.msra.mxu0 0.0
    %789 = vmatprep.subr.mxu0 0.0
    %790 = vmatpush1.msra.mxu0 0.0
    %791 = vmatprep.subr.mxu0 0.0
    %792 = vmatpush1.msra.mxu0 0.0
    %793 = vmatprep.subr.mxu0 0.0
    %794 = vmatpush1.msra.mxu0 0.0
    %795 = vmatprep.subr.mxu0 0.0
    %796 = vmatpush1.msra.mxu0 %v230
    %797 = vmatprep.subr.mxu0 0.0
    %798 = vmatpush2.msra.mxu0 0.0
    %799 = vmatprep.subr.mxu0 0.0
    %800 = vmatpush2.msra.mxu0 0.0
    %801 = vmatprep.subr.mxu0 0.0
    %802 = vmatpush2.msra.mxu0 0.0
    %803 = vmatprep.subr.mxu0 0.0
    %804 = vmatpush2.msra.mxu0 0.0
    %805 = vmatprep.subr.mxu0 0.0
    %806 = vmatpush2.msra.mxu0 0.0
    %807 = vmatprep.subr.mxu0 0.0
    %808 = vmatpush2.msra.mxu0 0.0
    %809 = vmatprep.subr.mxu0 0.0
    %810 = vmatpush2.msra.mxu0 0.0
    %811 = vmatprep.subr.mxu0 0.0
    %812 = vmatpush2.msra.mxu0 0.0
    %813 = vmatprep.subr.mxu0 0.0
    %814 = vmatpush2.msra.mxu0 0.0
    %815 = vmatprep.subr.mxu0 0.0
    %816 = vmatpush2.msra.mxu0 0.0
    %817 = vmatprep.subr.mxu0 0.0
    %818 = vmatpush2.msra.mxu0 0.0
    %819 = vmatprep.subr.mxu0 0.0
    %820 = vmatpush2.msra.mxu0 0.0
    %821 = vmatprep.subr.mxu0 0.0
    %822 = vmatpush2.msra.mxu0 0.0
    %823 = vmatprep.subr.mxu0 0.0
    %824 = vmatpush2.msra.mxu0 0.0
    %825 = vmatprep.subr.mxu0 0.0
    %826 = vmatpush2.msra.mxu0 0.0
    %827 = vmatprep.subr.mxu0 0.0
    %828 = vmatpush2.msra.mxu0 0.0
    %829 = vmatprep.mubr.f32.mxu0 0.0
    %830 = vmatmul.mubr.f32.gmra.mxu0 %v763
    %v831 = vpop.f32.mrf.mxu0
    %v832 = vadd.f32 0.0, %v831
    %v833 = vpop.f32.mrf.mxu0
    %834 = vdwg.mxu0
    %835 = vrot.lane.b32.xlu0 %v434, 88
    %v836 = vpop.permute.xlu0 %835
    %838 = vrot.lane.b32.xlu0 %v230, 120
    %v839 = vpop.permute.xlu0 %838
    %v841 = vsel %vm438, %v836, 0
    %843 = vmatprep.subr.mxu0 0.0
    %844 = vmatpush1.msra.mxu0 0.0
    %845 = vmatprep.subr.mxu0 0.0
    %846 = vmatpush1.msra.mxu0 0.0
    %847 = vmatprep.subr.mxu0 0.0
    %848 = vmatpush1.msra.mxu0 0.0
    %849 = vmatprep.subr.mxu0 0.0
    %850 = vmatpush1.msra.mxu0 0.0
    %851 = vmatprep.subr.mxu0 0.0
    %852 = vmatpush1.msra.mxu0 0.0
    %853 = vmatprep.subr.mxu0 0.0
    %854 = vmatpush1.msra.mxu0 0.0
    %855 = vmatprep.subr.mxu0 0.0
    %856 = vmatpush1.msra.mxu0 0.0
    %857 = vmatprep.subr.mxu0 0.0
    %858 = vmatpush1.msra.mxu0 0.0
    %859 = vmatprep.subr.mxu0 0.0
    %860 = vmatpush1.msra.mxu0 0.0
    %861 = vmatprep.subr.mxu0 0.0
    %862 = vmatpush1.msra.mxu0 0.0
    %863 = vmatprep.subr.mxu0 0.0
    %864 = vmatpush1.msra.mxu0 0.0
    %865 = vmatprep.subr.mxu0 0.0
    %866 = vmatpush1.msra.mxu0 0.0
    %867 = vmatprep.subr.mxu0 0.0
    %868 = vmatpush1.msra.mxu0 0.0
    %869 = vmatprep.subr.mxu0 0.0
    %870 = vmatpush1.msra.mxu0 0.0
    %871 = vmatprep.subr.mxu0 0.0
    %872 = vmatpush1.msra.mxu0 0.0
    %873 = vmatprep.subr.mxu0 0.0
    %874 = vmatpush1.msra.mxu0 %v839
    %875 = vmatprep.subr.mxu0 0.0
    %876 = vmatpush2.msra.mxu0 0.0
    %877 = vmatprep.subr.mxu0 0.0
    %878 = vmatpush2.msra.mxu0 0.0
    %879 = vmatprep.subr.mxu0 0.0
    %880 = vmatpush2.msra.mxu0 0.0
    %881 = vmatprep.subr.mxu0 0.0
    %882 = vmatpush2.msra.mxu0 0.0
    %883 = vmatprep.subr.mxu0 0.0
    %884 = vmatpush2.msra.mxu0 0.0
    %885 = vmatprep.subr.mxu0 0.0
    %886 = vmatpush2.msra.mxu0 0.0
    %887 = vmatprep.subr.mxu0 0.0
    %888 = vmatpush2.msra.mxu0 0.0
    %889 = vmatprep.subr.mxu0 0.0
    %890 = vmatpush2.msra.mxu0 0.0
    %891 = vmatprep.subr.mxu0 0.0
    %892 = vmatpush2.msra.mxu0 0.0
    %893 = vmatprep.subr.mxu0 0.0
    %894 = vmatpush2.msra.mxu0 0.0
    %895 = vmatprep.subr.mxu0 0.0
    %896 = vmatpush2.msra.mxu0 0.0
    %897 = vmatprep.subr.mxu0 0.0
    %898 = vmatpush2.msra.mxu0 0.0
    %899 = vmatprep.subr.mxu0 0.0
    %900 = vmatpush2.msra.mxu0 0.0
    %901 = vmatprep.subr.mxu0 0.0
    %902 = vmatpush2.msra.mxu0 0.0
    %903 = vmatprep.subr.mxu0 0.0
    %904 = vmatpush2.msra.mxu0 0.0
    %905 = vmatprep.subr.mxu0 0.0
    %906 = vmatpush2.msra.mxu0 0.0
    %907 = vmatprep.mubr.f32.mxu0 0.0
    %908 = vmatmul.mubr.f32.gmra.mxu0 %v841
    %v909 = vpop.f32.mrf.mxu0
    %v910 = vadd.f32 0.0, %v909
    %v911 = vpop.f32.mrf.mxu0
    %912 = vdwg.mxu0
    %913 = vrot.lane.b32.xlu0 %v434, 80
    %v914 = vpop.permute.xlu0 %913
    %915 = vrot.lane.b32.xlu0 %v230, 112
    %v916 = vpop.permute.xlu0 %915
    %v918 = vsel %vm438, %v914, 0
    %920 = vmatprep.subr.mxu0 0.0
    %921 = vmatpush1.msra.mxu0 0.0
    %922 = vmatprep.subr.mxu0 0.0
    %923 = vmatpush1.msra.mxu0 0.0
    %924 = vmatprep.subr.mxu0 0.0
    %925 = vmatpush1.msra.mxu0 0.0
    %926 = vmatprep.subr.mxu0 0.0
    %927 = vmatpush1.msra.mxu0 0.0
    %928 = vmatprep.subr.mxu0 0.0
    %929 = vmatpush1.msra.mxu0 0.0
    %930 = vmatprep.subr.mxu0 0.0
    %931 = vmatpush1.msra.mxu0 0.0
    %932 = vmatprep.subr.mxu0 0.0
    %933 = vmatpush1.msra.mxu0 0.0
    %934 = vmatprep.subr.mxu0 0.0
    %935 = vmatpush1.msra.mxu0 0.0
    %936 = vmatprep.subr.mxu0 0.0
    %937 = vmatpush1.msra.mxu0 0.0
    %938 = vmatprep.subr.mxu0 0.0
    %939 = vmatpush1.msra.mxu0 0.0
    %940 = vmatprep.subr.mxu0 0.0
    %941 = vmatpush1.msra.mxu0 0.0
    %942 = vmatprep.subr.mxu0 0.0
    %943 = vmatpush1.msra.mxu0 0.0
    %944 = vmatprep.subr.mxu0 0.0
    %945 = vmatpush1.msra.mxu0 0.0
    %946 = vmatprep.subr.mxu0 0.0
    %947 = vmatpush1.msra.mxu0 0.0
    %948 = vmatprep.subr.mxu0 0.0
    %949 = vmatpush1.msra.mxu0 0.0
    %950 = vmatprep.subr.mxu0 0.0
    %951 = vmatpush1.msra.mxu0 %v916
    %952 = vmatprep.subr.mxu0 0.0
    %953 = vmatpush2.msra.mxu0 0.0
    %954 = vmatprep.subr.mxu0 0.0
    %955 = vmatpush2.msra.mxu0 0.0
    %956 = vmatprep.subr.mxu0 0.0
    %957 = vmatpush2.msra.mxu0 0.0
    %958 = vmatprep.subr.mxu0 0.0
    %959 = vmatpush2.msra.mxu0 0.0
    %960 = vmatprep.subr.mxu0 0.0
    %961 = vmatpush2.msra.mxu0 0.0
    %962 = vmatprep.subr.mxu0 0.0
    %963 = vmatpush2.msra.mxu0 0.0
    %964 = vmatprep.subr.mxu0 0.0
    %965 = vmatpush2.msra.mxu0 0.0
    %966 = vmatprep.subr.mxu0 0.0
    %967 = vmatpush2.msra.mxu0 0.0
    %968 = vmatprep.subr.mxu0 0.0
    %969 = vmatpush2.msra.mxu0 0.0
    %970 = vmatprep.subr.mxu0 0.0
    %971 = vmatpush2.msra.mxu0 0.0
    %972 = vmatprep.subr.mxu0 0.0
    %973 = vmatpush2.msra.mxu0 0.0
    %974 = vmatprep.subr.mxu0 0.0
    %975 = vmatpush2.msra.mxu0 0.0
    %976 = vmatprep.subr.mxu0 0.0
    %977 = vmatpush2.msra.mxu0 0.0
    %978 = vmatprep.subr.mxu0 0.0
    %979 = vmatpush2.msra.mxu0 0.0
    %980 = vmatprep.subr.mxu0 0.0
    %981 = vmatpush2.msra.mxu0 0.0
    %982 = vmatprep.subr.mxu0 0.0
    %983 = vmatpush2.msra.mxu0 0.0
    %984 = vmatprep.mubr.f32.mxu0 0.0
    %985 = vmatmul.mubr.f32.gmra.mxu0 %v918
    %v986 = vpop.f32.mrf.mxu0
    %v987 = vadd.f32 0.0, %v986
    %v988 = vpop.f32.mrf.mxu0
    %989 = vdwg.mxu0
    %990 = vrot.lane.b32.xlu0 %v434, 72
    %v991 = vpop.permute.xlu0 %990
    %992 = vrot.lane.b32.xlu0 %v230, 104
    %v993 = vpop.permute.xlu0 %992
    %v995 = vsel %vm438, %v991, 0
    %997 = vmatprep.subr.mxu0 0.0
    %998 = vmatpush1.msra.mxu0 0.0
    %999 = vmatprep.subr.mxu0 0.0
    %1000 = vmatpush1.msra.mxu0 0.0
    %1001 = vmatprep.subr.mxu0 0.0
    %1002 = vmatpush1.msra.mxu0 0.0
    %1003 = vmatprep.subr.mxu0 0.0
    %1004 = vmatpush1.msra.mxu0 0.0
    %1005 = vmatprep.subr.mxu0 0.0
    %1006 = vmatpush1.msra.mxu0 0.0
    %1007 = vmatprep.subr.mxu0 0.0
    %1008 = vmatpush1.msra.mxu0 0.0
    %1009 = vmatprep.subr.mxu0 0.0
    %1010 = vmatpush1.msra.mxu0 0.0
    %1011 = vmatprep.subr.mxu0 0.0
    %1012 = vmatpush1.msra.mxu0 0.0
    %1013 = vmatprep.subr.mxu0 0.0
    %1014 = vmatpush1.msra.mxu0 0.0
    %1015 = vmatprep.subr.mxu0 0.0
    %1016 = vmatpush1.msra.mxu0 0.0
    %1017 = vmatprep.subr.mxu0 0.0
    %1018 = vmatpush1.msra.mxu0 0.0
    %1019 = vmatprep.subr.mxu0 0.0
    %1020 = vmatpush1.msra.mxu0 0.0
    %1021 = vmatprep.subr.mxu0 0.0
    %1022 = vmatpush1.msra.mxu0 0.0
    %1023 = vmatprep.subr.mxu0 0.0
    %1024 = vmatpush1.msra.mxu0 0.0
    %1025 = vmatprep.subr.mxu0 0.0
    %1026 = vmatpush1.msra.mxu0 0.0
    %1027 = vmatprep.subr.mxu0 0.0
    %1028 = vmatpush1.msra.mxu0 %v993
    %1029 = vmatprep.subr.mxu0 0.0
    %1030 = vmatpush2.msra.mxu0 0.0
    %1031 = vmatprep.subr.mxu0 0.0
    %1032 = vmatpush2.msra.mxu0 0.0
    %1033 = vmatprep.subr.mxu0 0.0
    %1034 = vmatpush2.msra.mxu0 0.0
    %1035 = vmatprep.subr.mxu0 0.0
    %1036 = vmatpush2.msra.mxu0 0.0
    %1037 = vmatprep.subr.mxu0 0.0
    %1038 = vmatpush2.msra.mxu0 0.0
    %1039 = vmatprep.subr.mxu0 0.0
    %1040 = vmatpush2.msra.mxu0 0.0
    %1041 = vmatprep.subr.mxu0 0.0
    %1042 = vmatpush2.msra.mxu0 0.0
    %1043 = vmatprep.subr.mxu0 0.0
    %1044 = vmatpush2.msra.mxu0 0.0
    %1045 = vmatprep.subr.mxu0 0.0
    %1046 = vmatpush2.msra.mxu0 0.0
    %1047 = vmatprep.subr.mxu0 0.0
    %1048 = vmatpush2.msra.mxu0 0.0
    %1049 = vmatprep.subr.mxu0 0.0
    %1050 = vmatpush2.msra.mxu0 0.0
    %1051 = vmatprep.subr.mxu0 0.0
    %1052 = vmatpush2.msra.mxu0 0.0
    %1053 = vmatprep.subr.mxu0 0.0
    %1054 = vmatpush2.msra.mxu0 0.0
    %1055 = vmatprep.subr.mxu0 0.0
    %1056 = vmatpush2.msra.mxu0 0.0
    %1057 = vmatprep.subr.mxu0 0.0
    %1058 = vmatpush2.msra.mxu0 0.0
    %1059 = vmatprep.subr.mxu0 0.0
    %1060 = vmatpush2.msra.mxu0 0.0
    %1061 = vmatprep.mubr.f32.mxu0 0.0
    %1062 = vmatmul.mubr.f32.gmra.mxu0 %v995
    %v1063 = vpop.f32.mrf.mxu0
    %v1064 = vadd.f32 0.0, %v1063
    %v1065 = vpop.f32.mrf.mxu0
    %1066 = vdwg.mxu0
    %1068 = vrot.lane.b32.xlu0 %v910, 8
    %v1069 = vpop.permute.xlu0 %1068
    %1072 = vrot.lane.b32.xlu0 %v987, 16
    %v1073 = vpop.permute.xlu0 %1072
    %1076 = vrot.lane.b32.xlu0 %v1064, 24
    %v1077 = vpop.permute.xlu0 %1076
    %v1079 = vsel %vm438, %v832, %v1069
    %v1080 = vsel %vm756, %v1079, %v1073
    %v1081 = vsel %vm758, %v1080, %v1077
    %1084 = vrot.lane.b32.xlu0 %v759, 32
    %v1085 = vpop.permute.xlu0 %1084
    %1086 = vrot.lane.b32.xlu0 %v1081, 32
    %v1087 = vpop.permute.xlu0 %1086
    %v1090 = vsel %vm76, %v24, %v1085
    %v1091 = vsel %vm76, %v25, %v1087
    %v1092 = vlaneseq
    %v1093 = vshrl.u32 %v1092, 7
    %v1094 = vsub.s32 0, %v1093
    %v1095 = vrot.slane %v75, %v1094
    %vm1096 = vcmask 523264
    %v1098 = vsel %vm1096, %v1090, 0
    %v1101 = vsel %vm1096, %v1091, 0
    %1103 = vmatprep.subr.mxu0 0.0
    %1104 = vmatpush1.msra.mxu0 0.0
    %1105 = vmatprep.subr.mxu0 0.0
    %1106 = vmatpush1.msra.mxu0 0.0
    %1107 = vmatprep.subr.mxu0 0.0
    %1108 = vmatpush1.msra.mxu0 0.0
    %1109 = vmatprep.subr.mxu0 0.0
    %1110 = vmatpush1.msra.mxu0 0.0
    %1111 = vmatprep.subr.mxu0 0.0
    %1112 = vmatpush1.msra.mxu0 0.0
    %1113 = vmatprep.subr.mxu0 0.0
    %1114 = vmatpush1.msra.mxu0 0.0
    %1115 = vmatprep.subr.mxu0 0.0
    %1116 = vmatpush1.msra.mxu0 0.0
    %1117 = vmatprep.subr.mxu0 0.0
    %1118 = vmatpush1.msra.mxu0 0.0
    %1119 = vmatprep.subr.mxu0 0.0
    %1120 = vmatpush1.msra.mxu0 %v69
    %1121 = vmatprep.subr.mxu0 0.0
    %1122 = vmatpush1.msra.mxu0 %v68
    %1123 = vmatprep.subr.mxu0 0.0
    %1124 = vmatpush1.msra.mxu0 %v67
    %1125 = vmatprep.subr.mxu0 0.0
    %1126 = vmatpush1.msra.mxu0 %v66
    %1127 = vmatprep.subr.mxu0 0.0
    %1128 = vmatpush1.msra.mxu0 %v65
    %1129 = vmatprep.subr.mxu0 0.0
    %1130 = vmatpush1.msra.mxu0 %v64
    %1131 = vmatprep.subr.mxu0 0.0
    %1132 = vmatpush1.msra.mxu0 %v63
    %1133 = vmatprep.subr.mxu0 0.0
    %1134 = vmatpush1.msra.mxu0 %v62
    %1135 = vmatprep.subr.mxu0 0.0
    %1136 = vmatpush2.msra.mxu0 0.0
    %1137 = vmatprep.subr.mxu0 0.0
    %1138 = vmatpush2.msra.mxu0 0.0
    %1139 = vmatprep.subr.mxu0 0.0
    %1140 = vmatpush2.msra.mxu0 0.0
    %1141 = vmatprep.subr.mxu0 0.0
    %1142 = vmatpush2.msra.mxu0 0.0
    %1143 = vmatprep.subr.mxu0 0.0
    %1144 = vmatpush2.msra.mxu0 0.0
    %1145 = vmatprep.subr.mxu0 0.0
    %1146 = vmatpush2.msra.mxu0 0.0
    %1147 = vmatprep.subr.mxu0 0.0
    %1148 = vmatpush2.msra.mxu0 0.0
    %1149 = vmatprep.subr.mxu0 0.0
    %1150 = vmatpush2.msra.mxu0 0.0
    %1151 = vmatprep.subr.mxu0 0.0
    %1152 = vmatpush2.msra.mxu0 0.0
    %1153 = vmatprep.subr.mxu0 0.0
    %1154 = vmatpush2.msra.mxu0 0.0
    %1155 = vmatprep.subr.mxu0 0.0
    %1156 = vmatpush2.msra.mxu0 0.0
    %1157 = vmatprep.subr.mxu0 0.0
    %1158 = vmatpush2.msra.mxu0 0.0
    %1159 = vmatprep.subr.mxu0 0.0
    %1160 = vmatpush2.msra.mxu0 0.0
    %1161 = vmatprep.subr.mxu0 0.0
    %1162 = vmatpush2.msra.mxu0 0.0
    %1163 = vmatprep.subr.mxu0 0.0
    %1164 = vmatpush2.msra.mxu0 0.0
    %1165 = vmatprep.subr.mxu0 0.0
    %1166 = vmatpush2.msra.mxu0 0.0
    %1167 = vmatprep.mubr.f32.mxu0 0.0
    %1168 = vmatmul.mubr.f32.gmra.mxu0 %v1098
    %v1169 = vpop.f32.mrf.mxu0
    %v1170 = vadd.f32 %v1095, %v1169
    %v1171 = vpop.f32.mrf.mxu0
    %1172 = vmatprep.mubr.f32.mxu0 0.0
    %1173 = vmatmul.mubr.f32.gmra.mxu0 %v1101
    %v1174 = vpop.f32.mrf.mxu0
    %v1175 = vadd.f32 %v1095, %v1174
    %v1176 = vpop.f32.mrf.mxu0
    %1177 = vdwg.mxu0
    %1178 = vst.msk [vmem:[#allocation2] sm:$0xff] %vm76, %v1170
    %1179 = vst.msk [vmem:[#allocation2 + $0x8] sm:$0xff] %vm76, %v1175
    // Predicated region
    $region18: #{tpu_custom_call.1} parent=1 // pred_check
      _
    $region19: #{tpu_custom_call.1} parent=1 // pred_check_branch
      %1181 = sbr.rel (0) target = $region21
    $region20: #{tpu_custom_call.1} parent=1 // pred_region
      %s1183 = ssub.s32 256, 256
      %1184 = vsyncadd [#allocation3], %s1183
      %s1185 = sshll.u32 [#allocation2], 4
      %s1186 = int_to_ptr.vmem [resolvable:$true] %s1185
      %1191 = dma.vmem_to_hbm [thread:$0]  %s1186, 256, %s4, [#allocation3], 128, 128, 8
    $region21: #{tpu_custom_call.1} parent=1 // pred_fallthru
      _
    // Predicated region
    $region22: #{tpu_custom_call.1} parent=1 // pred_check
      _
    $region23: #{tpu_custom_call.1} parent=1 // pred_check_branch
      %1193 = sbr.rel (0) target = $region25
    $region24: #{tpu_custom_call.1} parent=1 // pred_region
      %1194 = dma.done [#allocation3], 256
    $region25: #{tpu_custom_call.1} parent=1 // pred_fallthru
      _
    %1195 = vsyncpa [#allocation3], 1

</llo_original>
